<compile_context>
chip_gen: v6e
topology: v6e:2x2x1
jax: 0.10.0
libtpu: 0.0.40
codegen_flags: <defaults>
</compile_context>

<pallas_src>
import numpy as np

import jax
import jax.numpy as jnp
from jax.experimental import pallas as pl
from jax.experimental.pallas import tpu as pltpu

BN_EPS = 1e-5
LANE = 128
_MIN_STREAM_BYTES_PER_STEP = 512 * 1024   # amortizes ~0.35us per-grid-step cost


# ---------------------------------------------------------------------------
# helpers
# ---------------------------------------------------------------------------
def _round_up(x, m):
    return ((x + m - 1) // m) * m


def _padded_vmem_bytes(shape, dtype):
    """Upper bound on the VMEM footprint of one block ((8,128) tile padding)."""
    itemsize = np.dtype(dtype).itemsize
    shape = tuple(shape)
    if len(shape) == 1:
        shape = (1,) + shape
    lead = 1
    for d in shape[:-2]:
        lead *= d
    return lead * _round_up(shape[-2], 8) * _round_up(shape[-1], LANE) * itemsize


def _pick_tile_b(B, stream_row_bytes, max_tile_b):
    """Batch tile size.

    * multiple of 128 so every lane-dense block (ids / wide / output rows)
      satisfies the (8,128) divisibility rule,
    * big enough that each grid step moves >= ~512 KiB of the dominant stream
      (amortizes per-step overhead) when that target is reachable,
    * capped at ~half the batch when the batch allows >=2 grid steps, so v7x's
      two TensorCores both get work under dimension_semantics=("parallel",).
    """
    want_rows = max(_MIN_STREAM_BYTES_PER_STEP // max(stream_row_bytes, 1), 512)
    tb = max(LANE, min(_round_up(max_tile_b, LANE), _round_up(want_rows, LANE)))
    half = _round_up((B + 1) // 2, LANE)
    if B > LANE and (half * stream_row_bytes >= _MIN_STREAM_BYTES_PER_STEP
                     or B * stream_row_bytes < 2 * _MIN_STREAM_BYTES_PER_STEP):
        tb = min(tb, half)
    tb = min(tb, _round_up(B, LANE))
    return max(LANE, tb)


# ---------------------------------------------------------------------------
# kernels
# ---------------------------------------------------------------------------
def wd_gather_kernel(idx_ref, wide_ref, tab_ref, w1_ref, b1_ref,
                     w2_ref, b2_ref, wo_ref, out_ref):
    """Primary kernel: batch lives on the lane axis throughout.

    idx_ref : (F, TB) int32   per-field (offset) ids for this tile (streamed)
    wide_ref: (1, TB) f32     pre-reduced wide logit + folded biases (streamed)
    tab_ref : (E, V)          embedding table (transposed), resident in VMEM
    w1_ref  : (F, H1, E)      BN-folded layer-1 weight, per-field, resident
    b1_ref  : (H1, 1) f32
    w2_ref  : (H2, H1)        BN-folded layer-2 weight (transposed), resident
    b2_ref  : (H2, 1) f32
    wo_ref  : (H2, 1) f32     output projection weight
    out_ref : (1, TB) f32     sigmoid(wide + deep), lane-dense
    """
    F, TB = idx_ref.shape
    E, V = tab_ref.shape

    idx = idx_ref[...]                                            # (F, TB)
    tab = tab_ref[...]                                            # (E, V)
    w1 = w1_ref[...]                                              # (F, H1, E)
    pos = jax.lax.broadcasted_iota(jnp.int32, (V, TB), 0)

    # deep layer 1: in-kernel embedding gather (exact one-hot matmul on the
    # resident table) fused with the first linear layer, accumulated per field.
    h = None
    for f in range(F):                                            # static unroll
        onehot = (pos == idx[f:f + 1, :]).astype(tab.dtype)       # (V, TB)
        emb_t = jnp.dot(tab, onehot,
                        preferred_element_type=jnp.float32)       # (E, TB)
        contrib = jnp.dot(w1[f], emb_t.astype(w1.dtype),
                          preferred_element_type=jnp.float32)     # (H1, TB)
        h = contrib if h is None else h + contrib

    # BatchNorm is folded into w1/b1 (eval mode); ReLU.
    # TODO(synk): Dropout is identity in eval/inference mode; omitted on purpose.
    h = jnp.maximum(h + b1_ref[...], 0.0)                         # (H1, TB)

    # deep layer 2 (BN folded), ReLU.
    h = jnp.dot(w2_ref[...], h.astype(w2_ref.dtype),
                preferred_element_type=jnp.float32)
    h = jnp.maximum(h + b2_ref[...], 0.0)                         # (H2, TB)

    # width-1 output projection: VPU multiply + sublane (XLU) reduce keeps the
    # result lane-dense as a (1, TB) row -> unmasked vst stores.
    deep = jnp.sum(h * wo_ref[...], axis=0, keepdims=True)        # (1, TB)

    out_ref[...] = jax.nn.sigmoid(deep + wide_ref[...])


def wd_stream_kernel(embed_ref, wide_ref, w1_ref, b1_ref, w2_ref, b2_ref,
                     wo_ref, out_ref):
    """Fallback kernel (table too large for VMEM): streamed XLA-gathered
    activations, batch on the sublane axis."""
    x = embed_ref[...]                                            # (TB, FE)

    h = jnp.dot(x, w1_ref[...], preferred_element_type=jnp.float32)
    h = jnp.maximum(h + b1_ref[...], 0.0)                         # (TB, H1)

    h = jnp.dot(h.astype(w2_ref.dtype), w2_ref[...],
                preferred_element_type=jnp.float32)
    h = jnp.maximum(h + b2_ref[...], 0.0)                         # (TB, H2)

    deep = jnp.sum(h * wo_ref[...], axis=-1, keepdims=True)       # (TB, 1)
    out_ref[...] = jax.nn.sigmoid(deep + wide_ref[...])


# ---------------------------------------------------------------------------
# wrappers
# ---------------------------------------------------------------------------
def _forward_gather(idx, wide, emb_table, w1, b1, w2, b2, wo,
                    B, Bp, TB, num_tiles, matmul_dtype):
    vocab, E = emb_table.shape
    F = idx.shape[1]
    FE, H1 = w1.shape
    H2 = w2.shape[1]
    mm_itemsize = np.dtype(matmul_dtype).itemsize

    idx_t = idx.T                                           # (F, Bp), lane-dense
    wide_t = wide.reshape(1, Bp).astype(jnp.float32)        # (1, Bp), lane-dense

    tab_t = emb_table.T.astype(matmul_dtype)                # (E, V) resident
    w1_pf = (w1.reshape(F, E, H1).transpose(0, 2, 1)        # (F, H1, E) per-field
             .astype(matmul_dtype))
    b1_c = b1.reshape(H1, 1).astype(jnp.float32)
    w2_t = w2.T.astype(matmul_dtype)                        # (H2, H1)
    b2_c = b2.reshape(H2, 1).astype(jnp.float32)
    wo_c = wo.reshape(H2, 1).astype(jnp.float32)

    # VMEM budget from actual (padded) buffer sizes + intermediates + headroom.
    stream_bytes = 2 * (_padded_vmem_bytes((F, TB), jnp.int32)
                        + 2 * _padded_vmem_bytes((1, TB), jnp.float32))
    resident_bytes = 2 * (_padded_vmem_bytes((E, vocab), matmul_dtype)
                          + _padded_vmem_bytes((F, H1, E), matmul_dtype)
                          + _padded_vmem_bytes((H1, 1), jnp.float32)
                          + _padded_vmem_bytes((H2, H1), matmul_dtype)
                          + 2 * _padded_vmem_bytes((H2, 1), jnp.float32))
    interm_bytes = 2 * TB * (_round_up(vocab, 8) * mm_itemsize
                             + (E + H1 + H2 + 8) * 4)
    vmem_limit = int(max(8 << 20, min(48 << 20, stream_bytes + resident_bytes
                                      + interm_bytes + (2 << 20))))

    cost = pl.CostEstimate(
        flops=2 * Bp * (F * (vocab * E + E * H1) + H1 * H2 + H2),
        transcendentals=3 * Bp,
        bytes_accessed=(Bp * (F * 4 + 4 + 4)
                        + (vocab * E + FE * H1 + H1 * H2) * mm_itemsize
                        + (H1 + 2 * H2) * 4),
    )

    out = pl.pallas_call(
        wd_gather_kernel,
        out_shape=jax.ShapeDtypeStruct((1, Bp), jnp.float32),
        grid=(num_tiles,),
        in_specs=[
            # streamed per-batch-tile inputs (lane-dense, pipelined)
            pl.BlockSpec((F, TB), lambda i: (0, i)),
            pl.BlockSpec((1, TB), lambda i: (0, i)),
            # resident table / weights / biases (constant index_map)
            pl.BlockSpec((E, vocab), lambda i: (0, 0)),
            pl.BlockSpec((F, H1, E), lambda i: (0, 0, 0)),
            pl.BlockSpec((H1, 1), lambda i: (0, 0)),
            pl.BlockSpec((H2, H1), lambda i: (0, 0)),
            pl.BlockSpec((H2, 1), lambda i: (0, 0)),
            pl.BlockSpec((H2, 1), lambda i: (0, 0)),
        ],
        out_specs=pl.BlockSpec((1, TB), lambda i: (0, i)),
        compiler_params=pltpu.CompilerParams(
            dimension_semantics=("parallel",),
            vmem_limit_bytes=vmem_limit,
        ),
        cost_estimate=cost,
    )(idx_t, wide_t, tab_t, w1_pf, b1_c, w2_t, b2_c, wo_c)

    return out[0, :B]


def _forward_stream(idx, wide, emb_table, w1, b1, w2, b2, wo,
                    B, Bp, TB, num_tiles, matmul_dtype):
    vocab, E = emb_table.shape
    FE, H1 = w1.shape
    H2 = w2.shape[1]
    mm_itemsize = np.dtype(matmul_dtype).itemsize

    # XLA gather of the already-padded ids -> padded activations in one fused
    # producer (only used when the table itself cannot live in VMEM).
    embed_flat = emb_table[idx].reshape(Bp, FE).astype(matmul_dtype)
    wide_c = wide.reshape(Bp, 1).astype(jnp.float32)

    w1_m = w1.astype(matmul_dtype)
    b1_r = b1.reshape(1, H1).astype(jnp.float32)
    w2_m = w2.astype(matmul_dtype)
    b2_r = b2.reshape(1, H2).astype(jnp.float32)
    wo_r = wo.reshape(1, H2).astype(jnp.float32)

    stream_bytes = 2 * (_padded_vmem_bytes((TB, FE), matmul_dtype)
                        + 2 * _padded_vmem_bytes((TB, 1), jnp.float32))
    resident_bytes = 2 * (_padded_vmem_bytes((FE, H1), matmul_dtype)
                          + _padded_vmem_bytes((H1, H2), matmul_dtype)
                          + _padded_vmem_bytes((1, H1), jnp.float32)
                          + 2 * _padded_vmem_bytes((1, H2), jnp.float32))
    interm_bytes = 2 * TB * (H1 + H2 + 8) * 4
    vmem_limit = int(max(8 << 20, min(48 << 20, stream_bytes + resident_bytes
                                      + interm_bytes + (2 << 20))))

    cost = pl.CostEstimate(
        flops=2 * Bp * (FE * H1 + H1 * H2 + H2),
        transcendentals=3 * Bp,
        bytes_accessed=(Bp * (FE * mm_itemsize + 4 + 4)
                        + (FE * H1 + H1 * H2) * mm_itemsize
                        + (H1 + 3 * H2) * 4),
    )

    out = pl.pallas_call(
        wd_stream_kernel,
        out_shape=jax.ShapeDtypeStruct((Bp, 1), jnp.float32),
        grid=(num_tiles,),
        in_specs=[
            pl.BlockSpec((TB, FE), lambda i: (i, 0)),
            pl.BlockSpec((TB, 1), lambda i: (i, 0)),
            pl.BlockSpec((FE, H1), lambda i: (0, 0)),
            pl.BlockSpec((1, H1), lambda i: (0, 0)),
            pl.BlockSpec((H1, H2), lambda i: (0, 0)),
            pl.BlockSpec((1, H2), lambda i: (0, 0)),
            pl.BlockSpec((1, H2), lambda i: (0, 0)),
        ],
        out_specs=pl.BlockSpec((TB, 1), lambda i: (i, 0)),
        compiler_params=pltpu.CompilerParams(
            dimension_semantics=("parallel",),
            vmem_limit_bytes=vmem_limit,
        ),
        cost_estimate=cost,
    )(embed_flat, wide_c, w1_m, b1_r, w2_m, b2_r, wo_r)

    return out[:B, 0]


def wide_and_deep_forward(x_idx, params, *, matmul_dtype=jnp.bfloat16,
                          max_tile_b=4096, in_kernel_gather=None,
                          gather_vocab_limit=2048,
                          gather_table_vmem_limit=4 * 1024 * 1024):
    """x_idx: int (B, F) raw per-field indices. Returns float32 (B,)."""
    emb_table = params["emb_table"]
    vocab, E = emb_table.shape
    B, F = x_idx.shape
    FE = F * E
    mm_itemsize = np.dtype(matmul_dtype).itemsize

    idx = x_idx.astype(jnp.int32) + params["offsets"][None, :].astype(jnp.int32)

    # Wide path pre-reduced in XLA (f32); lin_bias and output-layer bias folded
    # into the same per-row value.
    wide = (jnp.sum(params["lin_table"][idx][..., 0].astype(jnp.float32), axis=1)
            + params["lin_bias"][0, 0] + params["bo"][0, 0])          # (B,)

    # Fold eval-mode BatchNorm into the linear layers (numerically identical
    # in eval mode): w' = w * g/sqrt(v+eps); b' = (b - m)*g/sqrt(v+eps) + beta
    s1 = params["g1"] / jnp.sqrt(params["v1"] + BN_EPS)
    w1 = params["w1"] * s1                                             # (FE, H1)
    b1 = (params["b1"] - params["m1"]) * s1 + params["beta1"]          # (1, H1)
    s2 = params["g2"] / jnp.sqrt(params["v2"] + BN_EPS)
    w2 = params["w2"] * s2                                             # (H1, H2)
    b2 = (params["b2"] - params["m2"]) * s2 + params["beta2"]          # (1, H2)

    if in_kernel_gather is None:
        in_kernel_gather = (vocab <= gather_vocab_limit
                            and vocab * E * mm_itemsize <= gather_table_vmem_limit)

    # Bytes per batch row of the streamed operands (drives tile sizing).
    if in_kernel_gather:
        stream_row_bytes = F * 4 + 4 + 4
    else:
        stream_row_bytes = FE * mm_itemsize + 4 + 4

    TB = _pick_tile_b(B, stream_row_bytes, max_tile_b)
    num_tiles = pl.cdiv(B, TB)
    Bp = num_tiles * TB

    # Pad the tiny int32 id array (not the gathered activations).
    if Bp != B:
        idx = jnp.pad(idx, ((0, Bp - B), (0, 0)))
        wide = jnp.pad(wide, (0, Bp - B))

    if in_kernel_gather:
        return _forward_gather(idx, wide, emb_table, w1, b1, w2, b2,
                               params["wo"], B, Bp, TB, num_tiles, matmul_dtype)
    return _forward_stream(idx, wide, emb_table, w1, b1, w2, b2,
                           params["wo"], B, Bp, TB, num_tiles, matmul_dtype)


# ---------------------------------------------------------------------------
# parameters + reference
# ---------------------------------------------------------------------------
def make_params(key, field_dims, embed_dim, mlp_dims):
    num_fields = len(field_dims)
    vocab = int(sum(field_dims))
    embed_output_dim = num_fields * embed_dim
    ks = jax.random.split(key, 16)

    def xavier(k, shape):
        fan_in, fan_out = shape[0], shape[1]
        limit = (6.0 / (fan_in + fan_out)) ** 0.5
        return jax.random.uniform(k, shape, jnp.float32, -limit, limit)

    h1, h2 = mlp_dims
    return {
        "offsets": jnp.array(
            [0] + list(jnp.cumsum(jnp.array(field_dims[:-1])).tolist()), jnp.int32),
        "emb_table": xavier(ks[0], (vocab, embed_dim)),
        "lin_table": xavier(ks[1], (vocab, 1)),
        "lin_bias": jnp.zeros((1, 1), jnp.float32),
        # layer 1
        "w1": xavier(ks[2], (embed_output_dim, h1)),
        "b1": 0.01 * jax.random.normal(ks[3], (1, h1), jnp.float32),
        "g1": 1.0 + 0.05 * jax.random.normal(ks[4], (1, h1), jnp.float32),
        "beta1": 0.02 * jax.random.normal(ks[5], (1, h1), jnp.float32),
        "m1": 0.01 * jax.random.normal(ks[6], (1, h1), jnp.float32),
        "v1": 1.0 + 0.1 * jax.random.uniform(ks[7], (1, h1), jnp.float32),
        # layer 2
        "w2": xavier(ks[8], (h1, h2)),
        "b2": 0.01 * jax.random.normal(ks[9], (1, h2), jnp.float32),
        "g2": 1.0 + 0.05 * jax.random.normal(ks[10], (1, h2), jnp.float32),
        "beta2": 0.02 * jax.random.normal(ks[11], (1, h2), jnp.float32),
        "m2": 0.01 * jax.random.normal(ks[12], (1, h2), jnp.float32),
        "v2": 1.0 + 0.1 * jax.random.uniform(ks[13], (1, h2), jnp.float32),
        # output layer
        "wo": xavier(ks[14], (h2, 1)),
        "bo": jnp.zeros((1, 1), jnp.float32),
    }


def reference_forward_np(x_idx, params):
    """Host-side float64 NumPy reference mirroring the torch forward (eval)."""
    p = {k: (np.asarray(v, np.float64) if np.issubdtype(np.asarray(v).dtype, np.floating)
             else np.asarray(v)) for k, v in params.items()}
    idx = np.asarray(x_idx) + p["offsets"][None, :]
    emb = p["emb_table"][idx]                                       # (B, F, E)
    B, F, E = emb.shape
    wide = p["lin_table"][idx][..., 0].sum(axis=1, keepdims=True) + p["lin_bias"][0, 0]
    h = emb.reshape(B, F * E)
    for (w, b, g, be, m, v) in ((p["w1"], p["b1"], p["g1"], p["beta1"], p["m1"], p["v1"]),
                                (p["w2"], p["b2"], p["g2"], p["beta2"], p["m2"], p["v2"])):
        h = h @ w + b
        h = (h - m) / np.sqrt(v + BN_EPS) * g + be
        h = np.maximum(h, 0.0)
    deep = h @ p["wo"] + p["bo"][0, 0]
    logit = (wide + deep)[:, 0]
    return 1.0 / (1.0 + np.exp(-logit))


# ---------------------------------------------------------------------------
# demo / self-test
# ---------------------------------------------------------------------------
if __name__ == "__main__":
    field_dims = (10, 20, 30, 40)    # 4 fields, vocab = 100
    embed_dim = 16                   # embed_output_dim = 64
    mlp_dims = (32, 16)
    batch = 8

    key = jax.random.PRNGKey(0)
    k_params, k_x = jax.random.split(key)
    params = make_params(k_params, field_dims, embed_dim, mlp_dims)

    # raw per-field indices, each within its own field's cardinality
    maxes = jnp.array(field_dims, jnp.int32)[None, :]
    x_idx = (jax.random.randint(k_x, (batch, len(field_dims)), 0, 1 << 30)
             % maxes).astype(jnp.int32)

    ref = reference_forward_np(x_idx, params)

    # f32 matmul path with the in-kernel (one-hot) gather; tolerance covers
    # TPU default matmul precision on either side.
    out_f32 = jax.block_until_ready(
        wide_and_deep_forward(x_idx, params, matmul_dtype=jnp.float32))
    assert out_f32.shape == (batch,)
    np.testing.assert_allclose(np.asarray(out_f32), ref, atol=2e-3, rtol=2e-3)

    # bf16 matmul-input fast path (default): f32 accumulation / epilogue.
    out_bf16 = jax.block_until_ready(wide_and_deep_forward(x_idx, params))
    assert out_bf16.shape == (batch,)
    np.testing.assert_allclose(np.asarray(out_bf16), ref, atol=2e-2, rtol=2e-2)

    # large-vocab fallback path (XLA gather + streamed activations).
    out_fb = jax.block_until_ready(
        wide_and_deep_forward(x_idx, params, matmul_dtype=jnp.float32,
                              in_kernel_gather=False))
    assert out_fb.shape == (batch,)
    np.testing.assert_allclose(np.asarray(out_fb), ref, atol=2e-3, rtol=2e-3)

    print("KERNEL_OK")
</pallas_src>

<mosaic_0001>
module attributes {stable_mosaic.version = 11 : i64} {
  func.func @wd_gather_kernel(%arg0: i32, %arg1: memref<4x128xi32, #tpu.memory_space<vmem>>, %arg2: memref<1x128xf32, #tpu.memory_space<vmem>>, %arg3: memref<16x100xf32, #tpu.memory_space<vmem>>, %arg4: memref<4x32x16xf32, #tpu.memory_space<vmem>>, %arg5: memref<32x1xf32, #tpu.memory_space<vmem>>, %arg6: memref<16x32xf32, #tpu.memory_space<vmem>>, %arg7: memref<16x1xf32, #tpu.memory_space<vmem>>, %arg8: memref<16x1xf32, #tpu.memory_space<vmem>>, %arg9: memref<1x128xf32, #tpu.memory_space<vmem>>) attributes {dimension_semantics = [#tpu.dimension_semantics<parallel>], iteration_bounds = array<i64: 1>, scalar_prefetch = 0 : i64, scratch_operands = 0 : i64, tpu.core_type = #tpu.core_type<tc>, window_params = [{transform_indices = @transform_0, window_bounds = array<i64: 4, 128>}, {transform_indices = @transform_1, window_bounds = array<i64: 1, 128>}, {pipeline_mode = #tpu.pipeline_mode<synchronous>, transform_indices = @transform_2, window_bounds = array<i64: 16, 100>}, {pipeline_mode = #tpu.pipeline_mode<synchronous>, transform_indices = @transform_3, window_bounds = array<i64: 4, 32, 16>}, {pipeline_mode = #tpu.pipeline_mode<synchronous>, transform_indices = @transform_4, window_bounds = array<i64: 32, 1>}, {pipeline_mode = #tpu.pipeline_mode<synchronous>, transform_indices = @transform_5, window_bounds = array<i64: 16, 32>}, {pipeline_mode = #tpu.pipeline_mode<synchronous>, transform_indices = @transform_6, window_bounds = array<i64: 16, 1>}, {pipeline_mode = #tpu.pipeline_mode<synchronous>, transform_indices = @transform_7, window_bounds = array<i64: 16, 1>}, {transform_indices = @transform_8, window_bounds = array<i64: 1, 128>}]} {
    %c0 = arith.constant 0 : index
    %c0_0 = arith.constant 0 : index
    %0 = vector.load %arg1[%c0, %c0_0] : memref<4x128xi32, #tpu.memory_space<vmem>>, vector<4x128xi32>
    %c0_1 = arith.constant 0 : index
    %c0_2 = arith.constant 0 : index
    %1 = vector.load %arg3[%c0_1, %c0_2] : memref<16x100xf32, #tpu.memory_space<vmem>>, vector<16x100xf32>
    %c0_3 = arith.constant 0 : index
    %c0_4 = arith.constant 0 : index
    %c0_5 = arith.constant 0 : index
    %2 = vector.load %arg4[%c0_3, %c0_4, %c0_5] : memref<4x32x16xf32, #tpu.memory_space<vmem>>, vector<4x32x16xf32>
    %3 = tpu.iota {dimensions = array<i32: 0>} : vector<100x128xi32>
    %4 = vector.extract_strided_slice %0 {offsets = [0, 0], sizes = [1, 128], strides = [1, 1]} : vector<4x128xi32> to vector<1x128xi32>
    %5 = vector.broadcast %4 : vector<1x128xi32> to vector<100x128xi32>
    %6 = arith.cmpi eq, %3, %5 : vector<100x128xi32>
    %7 = arith.extui %6 : vector<100x128xi1> to vector<100x128xi32>
    %8 = arith.sitofp %7 : vector<100x128xi32> to vector<100x128xf32>
    %cst = arith.constant dense<0.000000e+00> : vector<16x128xf32>
    %9 = tpu.matmul %1, %8, %cst {dimension_numbers = #tpu.dot_dimension_numbers<[1], [0], [0], [1], [0, 0, 1, 1], [], []>} : vector<16x100xf32>, vector<100x128xf32>, vector<16x128xf32> -> vector<16x128xf32>
    %10 = vector.extract_strided_slice %2 {offsets = [0, 0, 0], sizes = [1, 32, 16], strides = [1, 1, 1]} : vector<4x32x16xf32> to vector<1x32x16xf32>
    %11 = vector.shape_cast %10 : vector<1x32x16xf32> to vector<32x16xf32>
    %cst_6 = arith.constant dense<0.000000e+00> : vector<32x128xf32>
    %12 = tpu.matmul %11, %9, %cst_6 {dimension_numbers = #tpu.dot_dimension_numbers<[1], [0], [0], [1], [0, 0, 1, 1], [], []>} : vector<32x16xf32>, vector<16x128xf32>, vector<32x128xf32> -> vector<32x128xf32>
    %13 = vector.extract_strided_slice %0 {offsets = [1, 0], sizes = [1, 128], strides = [1, 1]} : vector<4x128xi32> to vector<1x128xi32>
    %14 = vector.broadcast %13 : vector<1x128xi32> to vector<100x128xi32>
    %15 = arith.cmpi eq, %3, %14 : vector<100x128xi32>
    %16 = arith.extui %15 : vector<100x128xi1> to vector<100x128xi32>
    %17 = arith.sitofp %16 : vector<100x128xi32> to vector<100x128xf32>
    %cst_7 = arith.constant dense<0.000000e+00> : vector<16x128xf32>
    %18 = tpu.matmul %1, %17, %cst_7 {dimension_numbers = #tpu.dot_dimension_numbers<[1], [0], [0], [1], [0, 0, 1, 1], [], []>} : vector<16x100xf32>, vector<100x128xf32>, vector<16x128xf32> -> vector<16x128xf32>
    %19 = vector.extract_strided_slice %2 {offsets = [1, 0, 0], sizes = [1, 32, 16], strides = [1, 1, 1]} : vector<4x32x16xf32> to vector<1x32x16xf32>
    %20 = vector.shape_cast %19 : vector<1x32x16xf32> to vector<32x16xf32>
    %cst_8 = arith.constant dense<0.000000e+00> : vector<32x128xf32>
    %21 = tpu.matmul %20, %18, %cst_8 {dimension_numbers = #tpu.dot_dimension_numbers<[1], [0], [0], [1], [0, 0, 1, 1], [], []>} : vector<32x16xf32>, vector<16x128xf32>, vector<32x128xf32> -> vector<32x128xf32>
    %22 = arith.addf %12, %21 : vector<32x128xf32>
    %23 = vector.extract_strided_slice %0 {offsets = [2, 0], sizes = [1, 128], strides = [1, 1]} : vector<4x128xi32> to vector<1x128xi32>
    %24 = vector.broadcast %23 : vector<1x128xi32> to vector<100x128xi32>
    %25 = arith.cmpi eq, %3, %24 : vector<100x128xi32>
    %26 = arith.extui %25 : vector<100x128xi1> to vector<100x128xi32>
    %27 = arith.sitofp %26 : vector<100x128xi32> to vector<100x128xf32>
    %cst_9 = arith.constant dense<0.000000e+00> : vector<16x128xf32>
    %28 = tpu.matmul %1, %27, %cst_9 {dimension_numbers = #tpu.dot_dimension_numbers<[1], [0], [0], [1], [0, 0, 1, 1], [], []>} : vector<16x100xf32>, vector<100x128xf32>, vector<16x128xf32> -> vector<16x128xf32>
    %29 = vector.extract_strided_slice %2 {offsets = [2, 0, 0], sizes = [1, 32, 16], strides = [1, 1, 1]} : vector<4x32x16xf32> to vector<1x32x16xf32>
    %30 = vector.shape_cast %29 : vector<1x32x16xf32> to vector<32x16xf32>
    %cst_10 = arith.constant dense<0.000000e+00> : vector<32x128xf32>
    %31 = tpu.matmul %30, %28, %cst_10 {dimension_numbers = #tpu.dot_dimension_numbers<[1], [0], [0], [1], [0, 0, 1, 1], [], []>} : vector<32x16xf32>, vector<16x128xf32>, vector<32x128xf32> -> vector<32x128xf32>
    %32 = arith.addf %22, %31 : vector<32x128xf32>
    %33 = vector.extract_strided_slice %0 {offsets = [3, 0], sizes = [1, 128], strides = [1, 1]} : vector<4x128xi32> to vector<1x128xi32>
    %34 = vector.broadcast %33 : vector<1x128xi32> to vector<100x128xi32>
    %35 = arith.cmpi eq, %3, %34 : vector<100x128xi32>
    %36 = arith.extui %35 : vector<100x128xi1> to vector<100x128xi32>
    %37 = arith.sitofp %36 : vector<100x128xi32> to vector<100x128xf32>
    %cst_11 = arith.constant dense<0.000000e+00> : vector<16x128xf32>
    %38 = tpu.matmul %1, %37, %cst_11 {dimension_numbers = #tpu.dot_dimension_numbers<[1], [0], [0], [1], [0, 0, 1, 1], [], []>} : vector<16x100xf32>, vector<100x128xf32>, vector<16x128xf32> -> vector<16x128xf32>
    %39 = vector.extract_strided_slice %2 {offsets = [3, 0, 0], sizes = [1, 32, 16], strides = [1, 1, 1]} : vector<4x32x16xf32> to vector<1x32x16xf32>
    %40 = vector.shape_cast %39 : vector<1x32x16xf32> to vector<32x16xf32>
    %cst_12 = arith.constant dense<0.000000e+00> : vector<32x128xf32>
    %41 = tpu.matmul %40, %38, %cst_12 {dimension_numbers = #tpu.dot_dimension_numbers<[1], [0], [0], [1], [0, 0, 1, 1], [], []>} : vector<32x16xf32>, vector<16x128xf32>, vector<32x128xf32> -> vector<32x128xf32>
    %42 = arith.addf %32, %41 : vector<32x128xf32>
    %c0_13 = arith.constant 0 : index
    %c0_14 = arith.constant 0 : index
    %43 = vector.load %arg5[%c0_13, %c0_14] : memref<32x1xf32, #tpu.memory_space<vmem>>, vector<32x1xf32>
    %44 = vector.broadcast %43 : vector<32x1xf32> to vector<32x128xf32>
    %45 = arith.addf %42, %44 : vector<32x128xf32>
    %cst_15 = arith.constant 0.000000e+00 : f32
    %46 = vector.broadcast %cst_15 : f32 to vector<32x128xf32>
    %47 = arith.maximumf %45, %46 : vector<32x128xf32>
    %c0_16 = arith.constant 0 : index
    %c0_17 = arith.constant 0 : index
    %48 = vector.load %arg6[%c0_16, %c0_17] : memref<16x32xf32, #tpu.memory_space<vmem>>, vector<16x32xf32>
    %cst_18 = arith.constant dense<0.000000e+00> : vector<16x128xf32>
    %49 = tpu.matmul %48, %47, %cst_18 {dimension_numbers = #tpu.dot_dimension_numbers<[1], [0], [0], [1], [0, 0, 1, 1], [], []>} : vector<16x32xf32>, vector<32x128xf32>, vector<16x128xf32> -> vector<16x128xf32>
    %c0_19 = arith.constant 0 : index
    %c0_20 = arith.constant 0 : index
    %50 = vector.load %arg7[%c0_19, %c0_20] : memref<16x1xf32, #tpu.memory_space<vmem>>, vector<16x1xf32>
    %51 = vector.broadcast %50 : vector<16x1xf32> to vector<16x128xf32>
    %52 = arith.addf %49, %51 : vector<16x128xf32>
    %cst_21 = arith.constant 0.000000e+00 : f32
    %53 = vector.broadcast %cst_21 : f32 to vector<16x128xf32>
    %54 = arith.maximumf %52, %53 : vector<16x128xf32>
    %c0_22 = arith.constant 0 : index
    %c0_23 = arith.constant 0 : index
    %55 = vector.load %arg8[%c0_22, %c0_23] : memref<16x1xf32, #tpu.memory_space<vmem>>, vector<16x1xf32>
    %56 = vector.broadcast %55 : vector<16x1xf32> to vector<16x128xf32>
    %57 = arith.mulf %54, %56 : vector<16x128xf32>
    %cst_24 = arith.constant dense<0.000000e+00> : vector<128xf32>
    %58 = vector.multi_reduction <add>, %57, %cst_24 [0] : vector<16x128xf32> to vector<128xf32>
    %59 = vector.shape_cast %58 : vector<128xf32> to vector<1x128xf32>
    %c0_25 = arith.constant 0 : index
    %c0_26 = arith.constant 0 : index
    %60 = vector.load %arg2[%c0_25, %c0_26] : memref<1x128xf32, #tpu.memory_space<vmem>>, vector<1x128xf32>
    %61 = arith.addf %59, %60 : vector<1x128xf32>
    %62 = arith.negf %61 : vector<1x128xf32>
    %63 = math.exp %62 : vector<1x128xf32>
    %cst_27 = arith.constant 1.000000e+00 : f32
    %64 = vector.broadcast %cst_27 : f32 to vector<1x128xf32>
    %65 = arith.addf %64, %63 : vector<1x128xf32>
    %66 = arith.divf %64, %65 : vector<1x128xf32>
    %c0_28 = arith.constant 0 : index
    %c0_29 = arith.constant 0 : index
    %67 = vector.load %arg9[%c0_28, %c0_29] : memref<1x128xf32, #tpu.memory_space<vmem>>, vector<1x128xf32>
    tpu.vector_store %arg9[%c0_28, %c0_29], %66 {strides = array<i32>} : memref<1x128xf32, #tpu.memory_space<vmem>>, vector<1x128xf32>,
    return
  }
  func.func @transform_0(%arg0: i32) -> (i32, i32) {
    %c0_i32 = arith.constant 0 : i32
    %c0_i32_0 = arith.constant 0 : i32
    return %c0_i32, %arg0 : i32, i32
  }
  func.func @transform_1(%arg0: i32) -> (i32, i32) {
    %c0_i32 = arith.constant 0 : i32
    %c0_i32_0 = arith.constant 0 : i32
    return %c0_i32, %arg0 : i32, i32
  }
  func.func @transform_2(%arg0: i32) -> (i32, i32) {
    %c0_i32 = arith.constant 0 : i32
    %c0_i32_0 = arith.constant 0 : i32
    %c0_i32_1 = arith.constant 0 : i32
    return %c0_i32, %c0_i32_0 : i32, i32
  }
  func.func @transform_3(%arg0: i32) -> (i32, i32, i32) {
    %c0_i32 = arith.constant 0 : i32
    %c0_i32_0 = arith.constant 0 : i32
    %c0_i32_1 = arith.constant 0 : i32
    %c0_i32_2 = arith.constant 0 : i32
    return %c0_i32, %c0_i32_0, %c0_i32_1 : i32, i32, i32
  }
  func.func @transform_4(%arg0: i32) -> (i32, i32) {
    %c0_i32 = arith.constant 0 : i32
    %c0_i32_0 = arith.constant 0 : i32
    %c0_i32_1 = arith.constant 0 : i32
    return %c0_i32, %c0_i32_0 : i32, i32
  }
  func.func @transform_5(%arg0: i32) -> (i32, i32) {
    %c0_i32 = arith.constant 0 : i32
    %c0_i32_0 = arith.constant 0 : i32
    %c0_i32_1 = arith.constant 0 : i32
    return %c0_i32, %c0_i32_0 : i32, i32
  }
  func.func @transform_6(%arg0: i32) -> (i32, i32) {
    %c0_i32 = arith.constant 0 : i32
    %c0_i32_0 = arith.constant 0 : i32
    %c0_i32_1 = arith.constant 0 : i32
    return %c0_i32, %c0_i32_0 : i32, i32
  }
  func.func @transform_7(%arg0: i32) -> (i32, i32) {
    %c0_i32 = arith.constant 0 : i32
    %c0_i32_0 = arith.constant 0 : i32
    %c0_i32_1 = arith.constant 0 : i32
    return %c0_i32, %c0_i32_0 : i32, i32
  }
  func.func @transform_8(%arg0: i32) -> (i32, i32) {
    %c0_i32 = arith.constant 0 : i32
    %c0_i32_0 = arith.constant 0 : i32
    return %c0_i32, %arg0 : i32, i32
  }
}

</mosaic_0001>

<llo_original>
// kernel: tpu_custom_call.1
$region0: #{tpu_custom_call.1}
  #allocation0 [shape = 'u32[]', space=smem, size = 0x4, offset = 0x4, fixed_abs, tag = 'smem constant byte address 0x4 - core index']
  #allocation1 [shape = 'u32[144,128]{1,0:T(1,128)}', space=vmem, size = 0x12000, scoped, tag = 'internal scratch']
  %s0 = inlined_call_operand.vmem [shape: s32[4,128], index: 0, kind: input, shape index: {}]
  %s1 = inlined_call_operand.vmem [shape: f32[1,128], index: 1, kind: input, shape index: {}]
  %s2 = inlined_call_operand.vmem [shape: f32[16,100], index: 2, kind: input, shape index: {}]
  %s3 = inlined_call_operand.vmem [shape: f32[4,32,16], index: 3, kind: input, shape index: {}]
  %s4 = inlined_call_operand.vmem [shape: f32[32,1], index: 4, kind: input, shape index: {}]
  %s5 = inlined_call_operand.vmem [shape: f32[16,32], index: 5, kind: input, shape index: {}]
  %s6 = inlined_call_operand.vmem [shape: f32[16,1], index: 6, kind: input, shape index: {}]
  %s7 = inlined_call_operand.vmem [shape: f32[16,1], index: 7, kind: input, shape index: {}]
  %s8 = inlined_call_operand.hbm [shape: f32[1,128], index: 8, kind: output, shape index: {}]
  %s9 = sld [smem:[#allocation0]]
  $region42: #{tpu_custom_call.1} parent=0
    _
  %s11 = ssub.s32 1, %s9
  %s12 = scalar_select 0, %s11, %s9
  $region1: #{tpu_custom_call.1} parent=0
    #allocation2 [shape = 'u8[512]{0}', space=vmem, size = 0x400, scoped, tag = 'output window, operand 0, single buffered']
    #allocation3 [shape = 's32[1]{0}', space=sflag, size = 0x4, scoped, tag = 'scoped memory for tpu_custom_call.1']
    %13 = vsyncpa [#allocation3], 0
    // Predicated region
    $region2: #{tpu_custom_call.1} parent=1 // pred_check
      _
    $region3: #{tpu_custom_call.1} parent=1 // pred_check_branch
      %15 = sbr.rel (0) target = $region5
    $region4: #{tpu_custom_call.1} parent=1 // pred_region
      _
    $region5: #{tpu_custom_call.1} parent=1 // pred_fallthru
      _
    // Predicated region
    $region6: #{tpu_custom_call.1} parent=1 // pred_check
      _
    $region7: #{tpu_custom_call.1} parent=1 // pred_check_branch
      %17 = sbr.rel (0) target = $region9
    $region8: #{tpu_custom_call.1} parent=1 // pred_region
      _
    $region9: #{tpu_custom_call.1} parent=1 // pred_fallthru
      _
    // Predicated region
    $region10: #{tpu_custom_call.1} parent=1 // pred_check
      _
    $region11: #{tpu_custom_call.1} parent=1 // pred_check_branch
      %19 = sbr.rel (0) target = $region13
    $region12: #{tpu_custom_call.1} parent=1 // pred_region
      _
    $region13: #{tpu_custom_call.1} parent=1 // pred_fallthru
      _
    // Predicated region
    $region14: #{tpu_custom_call.1} parent=1 // pred_check
      _
    $region15: #{tpu_custom_call.1} parent=1 // pred_check_branch
      %21 = sbr.rel (0) target = $region17
    $region16: #{tpu_custom_call.1} parent=1 // pred_region
      _
    $region17: #{tpu_custom_call.1} parent=1 // pred_fallthru
      _
    // Predicated region
    $region18: #{tpu_custom_call.1} parent=1 // pred_check
      _
    $region19: #{tpu_custom_call.1} parent=1 // pred_check_branch
      %23 = sbr.rel (0) target = $region21
    $region20: #{tpu_custom_call.1} parent=1 // pred_region
      _
    $region21: #{tpu_custom_call.1} parent=1 // pred_fallthru
      _
    // Predicated region
    $region22: #{tpu_custom_call.1} parent=1 // pred_check
      _
    $region23: #{tpu_custom_call.1} parent=1 // pred_check_branch
      %25 = sbr.rel (0) target = $region25
    $region24: #{tpu_custom_call.1} parent=1 // pred_region
      _
    $region25: #{tpu_custom_call.1} parent=1 // pred_fallthru
      _
    // Predicated region
    $region26: #{tpu_custom_call.1} parent=1 // pred_check
      _
    $region27: #{tpu_custom_call.1} parent=1 // pred_check_branch
      %27 = sbr.rel (0) target = $region29
    $region28: #{tpu_custom_call.1} parent=1 // pred_region
      _
    $region29: #{tpu_custom_call.1} parent=1 // pred_fallthru
      _
    // Predicated region
    $region30: #{tpu_custom_call.1} parent=1 // pred_check
      _
    $region31: #{tpu_custom_call.1} parent=1 // pred_check_branch
      %29 = sbr.rel (0) target = $region33
    $region32: #{tpu_custom_call.1} parent=1 // pred_region
      _
    $region33: #{tpu_custom_call.1} parent=1 // pred_fallthru
      _
    %v30 = vld [vmem:[%s0] sm:$0xf]
    %v31 = vld [vmem:[%s2] sm:$0xff]
    %v32 = vld [vmem:[%s2 + $0x8] sm:$0xff]
    %v33 = vld [vmem:[%s3] sm:$0xff]
    %v34 = vld [vmem:[%s3 + $0x8] sm:$0xff]
    %v35 = vld [vmem:[%s3 + $0x10] sm:$0xff]
    %v36 = vld [vmem:[%s3 + $0x18] sm:$0xff]
    %v37 = vld [vmem:[%s3 + $0x20] sm:$0xff]
    %v38 = vld [vmem:[%s3 + $0x28] sm:$0xff]
    %v39 = vld [vmem:[%s3 + $0x30] sm:$0xff]
    %v40 = vld [vmem:[%s3 + $0x38] sm:$0xff]
    %v41 = vld [vmem:[%s3 + $0x40] sm:$0xff]
    %v42 = vld [vmem:[%s3 + $0x48] sm:$0xff]
    %v43 = vld [vmem:[%s3 + $0x50] sm:$0xff]
    %v44 = vld [vmem:[%s3 + $0x58] sm:$0xff]
    %v45 = vld [vmem:[%s3 + $0x60] sm:$0xff]
    %v46 = vld [vmem:[%s3 + $0x68] sm:$0xff]
    %v47 = vld [vmem:[%s3 + $0x70] sm:$0xff]
    %v48 = vld [vmem:[%s3 + $0x78] sm:$0xff]
    %v49 = vlaneseq
    %v50 = vshrl.u32 %v49, 7
    %v51 = vadd.s32 %v50, 8
    %v52 = vadd.s32 %v50, 16
    %v53 = vadd.s32 %v50, 24
    %v54 = vadd.s32 %v50, 32
    %v55 = vadd.s32 %v50, 40
    %v56 = vadd.s32 %v50, 48
    %v57 = vadd.s32 %v50, 56
    %v58 = vadd.s32 %v50, 64
    %v59 = vadd.s32 %v50, 72
    %v60 = vadd.s32 %v50, 80
    %v61 = vadd.s32 %v50, 88
    %v62 = vadd.s32 %v50, 96
    %v63 = vlaneseq
    %v64 = vshrl.u32 %v63, 7
    %v65 = vsub.s32 0, %v64
    %v66 = vrot.slane %v30, %v65
    %vm67 = vcmp.eq.s32.totalorder %v50, %v66
    %vm68 = vcmp.eq.s32.totalorder %v51, %v66
    %vm69 = vcmp.eq.s32.totalorder %v52, %v66
    %vm70 = vcmp.eq.s32.totalorder %v53, %v66
    %vm71 = vcmp.eq.s32.totalorder %v54, %v66
    %vm72 = vcmp.eq.s32.totalorder %v55, %v66
    %vm73 = vcmp.eq.s32.totalorder %v56, %v66
    %vm74 = vcmp.eq.s32.totalorder %v57, %v66
    %vm75 = vcmp.eq.s32.totalorder %v58, %v66
    %vm76 = vcmp.eq.s32.totalorder %v59, %v66
    %vm77 = vcmp.eq.s32.totalorder %v60, %v66
    %vm78 = vcmp.eq.s32.totalorder %v61, %v66
    %vm79 = vcmp.eq.s32.totalorder %v62, %v66
    %v80 = vsel %vm67, 1, 0
    %v81 = vsel %vm68, 1, 0
    %v82 = vsel %vm69, 1, 0
    %v83 = vsel %vm70, 1, 0
    %v84 = vsel %vm71, 1, 0
    %v85 = vsel %vm72, 1, 0
    %v86 = vsel %vm73, 1, 0
    %v87 = vsel %vm74, 1, 0
    %v88 = vsel %vm75, 1, 0
    %v89 = vsel %vm76, 1, 0
    %v90 = vsel %vm77, 1, 0
    %v91 = vsel %vm78, 1, 0
    %v92 = vsel %vm79, 1, 0
    %v93 = vcvt.s32.f32 %v80
    %v94 = vcvt.s32.f32 %v81
    %v95 = vcvt.s32.f32 %v82
    %v96 = vcvt.s32.f32 %v83
    %v97 = vcvt.s32.f32 %v84
    %v98 = vcvt.s32.f32 %v85
    %v99 = vcvt.s32.f32 %v86
    %v100 = vcvt.s32.f32 %v87
    %v101 = vcvt.s32.f32 %v88
    %v102 = vcvt.s32.f32 %v89
    %v103 = vcvt.s32.f32 %v90
    %v104 = vcvt.s32.f32 %v91
    %v105 = vcvt.s32.f32 %v92
    %vm106 = vcmask 818176
    %v108 = vsel %vm106, %v31, 0
    %v111 = vsel %vm106, %v32, 0
    %vm113 = vcmask 1043456
    %v115 = vsel %vm113, %v105, 0
    %117 = vmatprep.subr.mxu0 0.0
    %118 = vmatpush1.msra.mxu0 0.0
    %119 = vmatprep.subr.mxu0 0.0
    %120 = vmatpush1.msra.mxu0 0.0
    %121 = vmatprep.subr.mxu0 0.0
    %122 = vmatpush1.msra.mxu0 0.0
    %123 = vmatprep.subr.mxu0 0.0
    %124 = vmatpush1.msra.mxu0 %v115
    %125 = vmatprep.subr.mxu0 0.0
    %126 = vmatpush1.msra.mxu0 %v104
    %127 = vmatprep.subr.mxu0 0.0
    %128 = vmatpush1.msra.mxu0 %v103
    %129 = vmatprep.subr.mxu0 0.0
    %130 = vmatpush1.msra.mxu0 %v102
    %131 = vmatprep.subr.mxu0 0.0
    %132 = vmatpush1.msra.mxu0 %v101
    %133 = vmatprep.subr.mxu0 0.0
    %134 = vmatpush1.msra.mxu0 %v100
    %135 = vmatprep.subr.mxu0 0.0
    %136 = vmatpush1.msra.mxu0 %v99
    %137 = vmatprep.subr.mxu0 0.0
    %138 = vmatpush1.msra.mxu0 %v98
    %139 = vmatprep.subr.mxu0 0.0
    %140 = vmatpush1.msra.mxu0 %v97
    %141 = vmatprep.subr.mxu0 0.0
    %142 = vmatpush1.msra.mxu0 %v96
    %143 = vmatprep.subr.mxu0 0.0
    %144 = vmatpush1.msra.mxu0 %v95
    %145 = vmatprep.subr.mxu0 0.0
    %146 = vmatpush1.msra.mxu0 %v94
    %147 = vmatprep.subr.mxu0 0.0
    %148 = vmatpush1.msra.mxu0 %v93
    %149 = vmatprep.subr.mxu0 0.0
    %150 = vmatpush2.msra.mxu0 0.0
    %151 = vmatprep.subr.mxu0 0.0
    %152 = vmatpush2.msra.mxu0 0.0
    %153 = vmatprep.subr.mxu0 0.0
    %154 = vmatpush2.msra.mxu0 0.0
    %155 = vmatprep.subr.mxu0 0.0
    %156 = vmatpush2.msra.mxu0 0.0
    %157 = vmatprep.subr.mxu0 0.0
    %158 = vmatpush2.msra.mxu0 0.0
    %159 = vmatprep.subr.mxu0 0.0
    %160 = vmatpush2.msra.mxu0 0.0
    %161 = vmatprep.subr.mxu0 0.0
    %162 = vmatpush2.msra.mxu0 0.0
    %163 = vmatprep.subr.mxu0 0.0
    %164 = vmatpush2.msra.mxu0 0.0
    %165 = vmatprep.subr.mxu0 0.0
    %166 = vmatpush2.msra.mxu0 0.0
    %167 = vmatprep.subr.mxu0 0.0
    %168 = vmatpush2.msra.mxu0 0.0
    %169 = vmatprep.subr.mxu0 0.0
    %170 = vmatpush2.msra.mxu0 0.0
    %171 = vmatprep.subr.mxu0 0.0
    %172 = vmatpush2.msra.mxu0 0.0
    %173 = vmatprep.subr.mxu0 0.0
    %174 = vmatpush2.msra.mxu0 0.0
    %175 = vmatprep.subr.mxu0 0.0
    %176 = vmatpush2.msra.mxu0 0.0
    %177 = vmatprep.subr.mxu0 0.0
    %178 = vmatpush2.msra.mxu0 0.0
    %179 = vmatprep.subr.mxu0 0.0
    %180 = vmatpush2.msra.mxu0 0.0
    %181 = vmatprep.mubr.f32.mxu0 0.0
    %182 = vmatmul.mubr.f32.gmra.mxu0 %v108
    %v183 = vpop.f32.mrf.mxu0
    %v184 = vadd.f32 0.0, %v183
    %v185 = vpop.f32.mrf.mxu0
    %186 = vmatprep.mubr.f32.mxu0 0.0
    %187 = vmatmul.mubr.f32.gmra.mxu0 %v111
    %v188 = vpop.f32.mrf.mxu0
    %v189 = vadd.f32 0.0, %v188
    %v190 = vpop.f32.mrf.mxu0
    %191 = vdwg.mxu0
    %v192 = vlaneseq
    %v193 = vshrl.u32 %v192, 7
    %v194 = vsub.s32 1, %v193
    %v195 = vrot.slane %v30, %v194
    %vm196 = vcmp.eq.s32.totalorder %v50, %v195
    %vm197 = vcmp.eq.s32.totalorder %v51, %v195
    %vm198 = vcmp.eq.s32.totalorder %v52, %v195
    %vm199 = vcmp.eq.s32.totalorder %v53, %v195
    %vm200 = vcmp.eq.s32.totalorder %v54, %v195
    %vm201 = vcmp.eq.s32.totalorder %v55, %v195
    %vm202 = vcmp.eq.s32.totalorder %v56, %v195
    %vm203 = vcmp.eq.s32.totalorder %v57, %v195
    %vm204 = vcmp.eq.s32.totalorder %v58, %v195
    %vm205 = vcmp.eq.s32.totalorder %v59, %v195
    %vm206 = vcmp.eq.s32.totalorder %v60, %v195
    %vm207 = vcmp.eq.s32.totalorder %v61, %v195
    %vm208 = vcmp.eq.s32.totalorder %v62, %v195
    %v209 = vsel %vm196, 1, 0
    %v210 = vsel %vm197, 1, 0
    %v211 = vsel %vm198, 1, 0
    %v212 = vsel %vm199, 1, 0
    %v213 = vsel %vm200, 1, 0
    %v214 = vsel %vm201, 1, 0
    %v215 = vsel %vm202, 1, 0
    %v216 = vsel %vm203, 1, 0
    %v217 = vsel %vm204, 1, 0
    %v218 = vsel %vm205, 1, 0
    %v219 = vsel %vm206, 1, 0
    %v220 = vsel %vm207, 1, 0
    %v221 = vsel %vm208, 1, 0
    %v222 = vcvt.s32.f32 %v209
    %v223 = vcvt.s32.f32 %v210
    %v224 = vcvt.s32.f32 %v211
    %v225 = vcvt.s32.f32 %v212
    %v226 = vcvt.s32.f32 %v213
    %v227 = vcvt.s32.f32 %v214
    %v228 = vcvt.s32.f32 %v215
    %v229 = vcvt.s32.f32 %v216
    %v230 = vcvt.s32.f32 %v217
    %v231 = vcvt.s32.f32 %v218
    %v232 = vcvt.s32.f32 %v219
    %v233 = vcvt.s32.f32 %v220
    %v234 = vcvt.s32.f32 %v221
    %v236 = vsel %vm113, %v234, 0
    %238 = vmatprep.subr.mxu0 0.0
    %239 = vmatpush1.msra.mxu0 0.0
    %240 = vmatprep.subr.mxu0 0.0
    %241 = vmatpush1.msra.mxu0 0.0
    %242 = vmatprep.subr.mxu0 0.0
    %243 = vmatpush1.msra.mxu0 0.0
    %244 = vmatprep.subr.mxu0 0.0
    %245 = vmatpush1.msra.mxu0 %v236
    %246 = vmatprep.subr.mxu0 0.0
    %247 = vmatpush1.msra.mxu0 %v233
    %248 = vmatprep.subr.mxu0 0.0
    %249 = vmatpush1.msra.mxu0 %v232
    %250 = vmatprep.subr.mxu0 0.0
    %251 = vmatpush1.msra.mxu0 %v231
    %252 = vmatprep.subr.mxu0 0.0
    %253 = vmatpush1.msra.mxu0 %v230
    %254 = vmatprep.subr.mxu0 0.0
    %255 = vmatpush1.msra.mxu0 %v229
    %256 = vmatprep.subr.mxu0 0.0
    %257 = vmatpush1.msra.mxu0 %v228
    %258 = vmatprep.subr.mxu0 0.0
    %259 = vmatpush1.msra.mxu0 %v227
    %260 = vmatprep.subr.mxu0 0.0
    %261 = vmatpush1.msra.mxu0 %v226
    %262 = vmatprep.subr.mxu0 0.0
    %263 = vmatpush1.msra.mxu0 %v225
    %264 = vmatprep.subr.mxu0 0.0
    %265 = vmatpush1.msra.mxu0 %v224
    %266 = vmatprep.subr.mxu0 0.0
    %267 = vmatpush1.msra.mxu0 %v223
    %268 = vmatprep.subr.mxu0 0.0
    %269 = vmatpush1.msra.mxu0 %v222
    %270 = vmatprep.subr.mxu0 0.0
    %271 = vmatpush2.msra.mxu0 0.0
    %272 = vmatprep.subr.mxu0 0.0
    %273 = vmatpush2.msra.mxu0 0.0
    %274 = vmatprep.subr.mxu0 0.0
    %275 = vmatpush2.msra.mxu0 0.0
    %276 = vmatprep.subr.mxu0 0.0
    %277 = vmatpush2.msra.mxu0 0.0
    %278 = vmatprep.subr.mxu0 0.0
    %279 = vmatpush2.msra.mxu0 0.0
    %280 = vmatprep.subr.mxu0 0.0
    %281 = vmatpush2.msra.mxu0 0.0
    %282 = vmatprep.subr.mxu0 0.0
    %283 = vmatpush2.msra.mxu0 0.0
    %284 = vmatprep.subr.mxu0 0.0
    %285 = vmatpush2.msra.mxu0 0.0
    %286 = vmatprep.subr.mxu0 0.0
    %287 = vmatpush2.msra.mxu0 0.0
    %288 = vmatprep.subr.mxu0 0.0
    %289 = vmatpush2.msra.mxu0 0.0
    %290 = vmatprep.subr.mxu0 0.0
    %291 = vmatpush2.msra.mxu0 0.0
    %292 = vmatprep.subr.mxu0 0.0
    %293 = vmatpush2.msra.mxu0 0.0
    %294 = vmatprep.subr.mxu0 0.0
    %295 = vmatpush2.msra.mxu0 0.0
    %296 = vmatprep.subr.mxu0 0.0
    %297 = vmatpush2.msra.mxu0 0.0
    %298 = vmatprep.subr.mxu0 0.0
    %299 = vmatpush2.msra.mxu0 0.0
    %300 = vmatprep.subr.mxu0 0.0
    %301 = vmatpush2.msra.mxu0 0.0
    %302 = vmatprep.mubr.f32.mxu0 0.0
    %303 = vmatmul.mubr.f32.gmra.mxu0 %v108
    %v304 = vpop.f32.mrf.mxu0
    %v305 = vadd.f32 0.0, %v304
    %v306 = vpop.f32.mrf.mxu0
    %307 = vmatprep.mubr.f32.mxu0 0.0
    %308 = vmatmul.mubr.f32.gmra.mxu0 %v111
    %v309 = vpop.f32.mrf.mxu0
    %v310 = vadd.f32 0.0, %v309
    %v311 = vpop.f32.mrf.mxu0
    %312 = vdwg.mxu0
    %vm313 = vcmask 130048
    %v315 = vsel %vm313, %v37, 0
    %v318 = vsel %vm313, %v38, 0
    %v321 = vsel %vm313, %v39, 0
    %v324 = vsel %vm313, %v40, 0
    %326 = vmatprep.subr.mxu0 0.0
    %327 = vmatpush1.msra.mxu0 0.0
    %328 = vmatprep.subr.mxu0 0.0
    %329 = vmatpush1.msra.mxu0 0.0
    %330 = vmatprep.subr.mxu0 0.0
    %331 = vmatpush1.msra.mxu0 0.0
    %332 = vmatprep.subr.mxu0 0.0
    %333 = vmatpush1.msra.mxu0 0.0
    %334 = vmatprep.subr.mxu0 0.0
    %335 = vmatpush1.msra.mxu0 0.0
    %336 = vmatprep.subr.mxu0 0.0
    %337 = vmatpush1.msra.mxu0 0.0
    %338 = vmatprep.subr.mxu0 0.0
    %339 = vmatpush1.msra.mxu0 0.0
    %340 = vmatprep.subr.mxu0 0.0
    %341 = vmatpush1.msra.mxu0 0.0
    %342 = vmatprep.subr.mxu0 0.0
    %343 = vmatpush1.msra.mxu0 0.0
    %344 = vmatprep.subr.mxu0 0.0
    %345 = vmatpush1.msra.mxu0 0.0
    %346 = vmatprep.subr.mxu0 0.0
    %347 = vmatpush1.msra.mxu0 0.0
    %348 = vmatprep.subr.mxu0 0.0
    %349 = vmatpush1.msra.mxu0 0.0
    %350 = vmatprep.subr.mxu0 0.0
    %351 = vmatpush1.msra.mxu0 0.0
    %352 = vmatprep.subr.mxu0 0.0
    %353 = vmatpush1.msra.mxu0 0.0
    %354 = vmatprep.subr.mxu0 0.0
    %355 = vmatpush1.msra.mxu0 %v310
    %356 = vmatprep.subr.mxu0 0.0
    %357 = vmatpush1.msra.mxu0 %v305
    %358 = vmatprep.subr.mxu0 0.0
    %359 = vmatpush2.msra.mxu0 0.0
    %360 = vmatprep.subr.mxu0 0.0
    %361 = vmatpush2.msra.mxu0 0.0
    %362 = vmatprep.subr.mxu0 0.0
    %363 = vmatpush2.msra.mxu0 0.0
    %364 = vmatprep.subr.mxu0 0.0
    %365 = vmatpush2.msra.mxu0 0.0
    %366 = vmatprep.subr.mxu0 0.0
    %367 = vmatpush2.msra.mxu0 0.0
    %368 = vmatprep.subr.mxu0 0.0
    %369 = vmatpush2.msra.mxu0 0.0
    %370 = vmatprep.subr.mxu0 0.0
    %371 = vmatpush2.msra.mxu0 0.0
    %372 = vmatprep.subr.mxu0 0.0
    %373 = vmatpush2.msra.mxu0 0.0
    %374 = vmatprep.subr.mxu0 0.0
    %375 = vmatpush2.msra.mxu0 0.0
    %376 = vmatprep.subr.mxu0 0.0
    %377 = vmatpush2.msra.mxu0 0.0
    %378 = vmatprep.subr.mxu0 0.0
    %379 = vmatpush2.msra.mxu0 0.0
    %380 = vmatprep.subr.mxu0 0.0
    %381 = vmatpush2.msra.mxu0 0.0
    %382 = vmatprep.subr.mxu0 0.0
    %383 = vmatpush2.msra.mxu0 0.0
    %384 = vmatprep.subr.mxu0 0.0
    %385 = vmatpush2.msra.mxu0 0.0
    %386 = vmatprep.subr.mxu0 0.0
    %387 = vmatpush2.msra.mxu0 0.0
    %388 = vmatprep.subr.mxu0 0.0
    %389 = vmatpush2.msra.mxu0 0.0
    %390 = vmatprep.mubr.f32.mxu0 0.0
    %391 = vmatmul.mubr.f32.gmra.mxu0 %v315
    %v392 = vpop.f32.mrf.mxu0
    %v393 = vadd.f32 0.0, %v392
    %v394 = vpop.f32.mrf.mxu0
    %395 = vmatprep.mubr.f32.mxu0 0.0
    %396 = vmatmul.mubr.f32.gmra.mxu0 %v318
    %v397 = vpop.f32.mrf.mxu0
    %v398 = vadd.f32 0.0, %v397
    %v399 = vpop.f32.mrf.mxu0
    %400 = vmatprep.mubr.f32.mxu0 0.0
    %401 = vmatmul.mubr.f32.gmra.mxu0 %v321
    %v402 = vpop.f32.mrf.mxu0
    %v403 = vadd.f32 0.0, %v402
    %v404 = vpop.f32.mrf.mxu0
    %405 = vmatprep.mubr.f32.mxu0 0.0
    %406 = vmatmul.mubr.f32.gmra.mxu0 %v324
    %v407 = vpop.f32.mrf.mxu0
    %v408 = vadd.f32 0.0, %v407
    %v409 = vpop.f32.mrf.mxu0
    %410 = vdwg.mxu0
    %v412 = vsel %vm313, %v33, 0
    %v415 = vsel %vm313, %v34, 0
    %v418 = vsel %vm313, %v35, 0
    %v421 = vsel %vm313, %v36, 0
    %423 = vmatprep.subr.mxu0 0.0
    %424 = vmatpush1.msra.mxu0 0.0
    %425 = vmatprep.subr.mxu0 0.0
    %426 = vmatpush1.msra.mxu0 0.0
    %427 = vmatprep.subr.mxu0 0.0
    %428 = vmatpush1.msra.mxu0 0.0
    %429 = vmatprep.subr.mxu0 0.0
    %430 = vmatpush1.msra.mxu0 0.0
    %431 = vmatprep.subr.mxu0 0.0
    %432 = vmatpush1.msra.mxu0 0.0
    %433 = vmatprep.subr.mxu0 0.0
    %434 = vmatpush1.msra.mxu0 0.0
    %435 = vmatprep.subr.mxu0 0.0
    %436 = vmatpush1.msra.mxu0 0.0
    %437 = vmatprep.subr.mxu0 0.0
    %438 = vmatpush1.msra.mxu0 0.0
    %439 = vmatprep.subr.mxu0 0.0
    %440 = vmatpush1.msra.mxu0 0.0
    %441 = vmatprep.subr.mxu0 0.0
    %442 = vmatpush1.msra.mxu0 0.0
    %443 = vmatprep.subr.mxu0 0.0
    %444 = vmatpush1.msra.mxu0 0.0
    %445 = vmatprep.subr.mxu0 0.0
    %446 = vmatpush1.msra.mxu0 0.0
    %447 = vmatprep.subr.mxu0 0.0
    %448 = vmatpush1.msra.mxu0 0.0
    %449 = vmatprep.subr.mxu0 0.0
    %450 = vmatpush1.msra.mxu0 0.0
    %451 = vmatprep.subr.mxu0 0.0
    %452 = vmatpush1.msra.mxu0 %v189
    %453 = vmatprep.subr.mxu0 0.0
    %454 = vmatpush1.msra.mxu0 %v184
    %455 = vmatprep.subr.mxu0 0.0
    %456 = vmatpush2.msra.mxu0 0.0
    %457 = vmatprep.subr.mxu0 0.0
    %458 = vmatpush2.msra.mxu0 0.0
    %459 = vmatprep.subr.mxu0 0.0
    %460 = vmatpush2.msra.mxu0 0.0
    %461 = vmatprep.subr.mxu0 0.0
    %462 = vmatpush2.msra.mxu0 0.0
    %463 = vmatprep.subr.mxu0 0.0
    %464 = vmatpush2.msra.mxu0 0.0
    %465 = vmatprep.subr.mxu0 0.0
    %466 = vmatpush2.msra.mxu0 0.0
    %467 = vmatprep.subr.mxu0 0.0
    %468 = vmatpush2.msra.mxu0 0.0
    %469 = vmatprep.subr.mxu0 0.0
    %470 = vmatpush2.msra.mxu0 0.0
    %471 = vmatprep.subr.mxu0 0.0
    %472 = vmatpush2.msra.mxu0 0.0
    %473 = vmatprep.subr.mxu0 0.0
    %474 = vmatpush2.msra.mxu0 0.0
    %475 = vmatprep.subr.mxu0 0.0
    %476 = vmatpush2.msra.mxu0 0.0
    %477 = vmatprep.subr.mxu0 0.0
    %478 = vmatpush2.msra.mxu0 0.0
    %479 = vmatprep.subr.mxu0 0.0
    %480 = vmatpush2.msra.mxu0 0.0
    %481 = vmatprep.subr.mxu0 0.0
    %482 = vmatpush2.msra.mxu0 0.0
    %483 = vmatprep.subr.mxu0 0.0
    %484 = vmatpush2.msra.mxu0 0.0
    %485 = vmatprep.subr.mxu0 0.0
    %486 = vmatpush2.msra.mxu0 0.0
    %487 = vmatprep.mubr.f32.mxu0 0.0
    %488 = vmatmul.mubr.f32.gmra.mxu0 %v412
    %v489 = vpop.f32.mrf.mxu0
    %v490 = vadd.f32 %v393, %v489
    %v491 = vpop.f32.mrf.mxu0
    %492 = vmatprep.mubr.f32.mxu0 0.0
    %493 = vmatmul.mubr.f32.gmra.mxu0 %v415
    %v494 = vpop.f32.mrf.mxu0
    %v495 = vadd.f32 %v398, %v494
    %v496 = vpop.f32.mrf.mxu0
    %497 = vmatprep.mubr.f32.mxu0 0.0
    %498 = vmatmul.mubr.f32.gmra.mxu0 %v418
    %v499 = vpop.f32.mrf.mxu0
    %v500 = vadd.f32 %v403, %v499
    %v501 = vpop.f32.mrf.mxu0
    %502 = vmatprep.mubr.f32.mxu0 0.0
    %503 = vmatmul.mubr.f32.gmra.mxu0 %v421
    %v504 = vpop.f32.mrf.mxu0
    %v505 = vadd.f32 %v408, %v504
    %v506 = vpop.f32.mrf.mxu0
    %507 = vdwg.mxu0
    %v508 = vlaneseq
    %v509 = vshrl.u32 %v508, 7
    %v510 = vsub.s32 2, %v509
    %v511 = vrot.slane %v30, %v510
    %vm512 = vcmp.eq.s32.totalorder %v50, %v511
    %vm513 = vcmp.eq.s32.totalorder %v51, %v511
    %vm514 = vcmp.eq.s32.totalorder %v52, %v511
    %vm515 = vcmp.eq.s32.totalorder %v53, %v511
    %vm516 = vcmp.eq.s32.totalorder %v54, %v511
    %vm517 = vcmp.eq.s32.totalorder %v55, %v511
    %vm518 = vcmp.eq.s32.totalorder %v56, %v511
    %vm519 = vcmp.eq.s32.totalorder %v57, %v511
    %vm520 = vcmp.eq.s32.totalorder %v58, %v511
    %vm521 = vcmp.eq.s32.totalorder %v59, %v511
    %vm522 = vcmp.eq.s32.totalorder %v60, %v511
    %vm523 = vcmp.eq.s32.totalorder %v61, %v511
    %vm524 = vcmp.eq.s32.totalorder %v62, %v511
    %v525 = vsel %vm512, 1, 0
    %v526 = vsel %vm513, 1, 0
    %v527 = vsel %vm514, 1, 0
    %v528 = vsel %vm515, 1, 0
    %v529 = vsel %vm516, 1, 0
    %v530 = vsel %vm517, 1, 0
    %v531 = vsel %vm518, 1, 0
    %v532 = vsel %vm519, 1, 0
    %v533 = vsel %vm520, 1, 0
    %v534 = vsel %vm521, 1, 0
    %v535 = vsel %vm522, 1, 0
    %v536 = vsel %vm523, 1, 0
    %v537 = vsel %vm524, 1, 0
    %v538 = vcvt.s32.f32 %v525
    %v539 = vcvt.s32.f32 %v526
    %v540 = vcvt.s32.f32 %v527
    %v541 = vcvt.s32.f32 %v528
    %v542 = vcvt.s32.f32 %v529
    %v543 = vcvt.s32.f32 %v530
    %v544 = vcvt.s32.f32 %v531
    %v545 = vcvt.s32.f32 %v532
    %v546 = vcvt.s32.f32 %v533
    %v547 = vcvt.s32.f32 %v534
    %v548 = vcvt.s32.f32 %v535
    %v549 = vcvt.s32.f32 %v536
    %v550 = vcvt.s32.f32 %v537
    %v552 = vsel %vm113, %v550, 0
    %554 = vmatprep.subr.mxu0 0.0
    %555 = vmatpush1.msra.mxu0 0.0
    %556 = vmatprep.subr.mxu0 0.0
    %557 = vmatpush1.msra.mxu0 0.0
    %558 = vmatprep.subr.mxu0 0.0
    %559 = vmatpush1.msra.mxu0 0.0
    %560 = vmatprep.subr.mxu0 0.0
    %561 = vmatpush1.msra.mxu0 %v552
    %562 = vmatprep.subr.mxu0 0.0
    %563 = vmatpush1.msra.mxu0 %v549
    %564 = vmatprep.subr.mxu0 0.0
    %565 = vmatpush1.msra.mxu0 %v548
    %566 = vmatprep.subr.mxu0 0.0
    %567 = vmatpush1.msra.mxu0 %v547
    %568 = vmatprep.subr.mxu0 0.0
    %569 = vmatpush1.msra.mxu0 %v546
    %570 = vmatprep.subr.mxu0 0.0
    %571 = vmatpush1.msra.mxu0 %v545
    %572 = vmatprep.subr.mxu0 0.0
    %573 = vmatpush1.msra.mxu0 %v544
    %574 = vmatprep.subr.mxu0 0.0
    %575 = vmatpush1.msra.mxu0 %v543
    %576 = vmatprep.subr.mxu0 0.0
    %577 = vmatpush1.msra.mxu0 %v542
    %578 = vmatprep.subr.mxu0 0.0
    %579 = vmatpush1.msra.mxu0 %v541
    %580 = vmatprep.subr.mxu0 0.0
    %581 = vmatpush1.msra.mxu0 %v540
    %582 = vmatprep.subr.mxu0 0.0
    %583 = vmatpush1.msra.mxu0 %v539
    %584 = vmatprep.subr.mxu0 0.0
    %585 = vmatpush1.msra.mxu0 %v538
    %586 = vmatprep.subr.mxu0 0.0
    %587 = vmatpush2.msra.mxu0 0.0
    %588 = vmatprep.subr.mxu0 0.0
    %589 = vmatpush2.msra.mxu0 0.0
    %590 = vmatprep.subr.mxu0 0.0
    %591 = vmatpush2.msra.mxu0 0.0
    %592 = vmatprep.subr.mxu0 0.0
    %593 = vmatpush2.msra.mxu0 0.0
    %594 = vmatprep.subr.mxu0 0.0
    %595 = vmatpush2.msra.mxu0 0.0
    %596 = vmatprep.subr.mxu0 0.0
    %597 = vmatpush2.msra.mxu0 0.0
    %598 = vmatprep.subr.mxu0 0.0
    %599 = vmatpush2.msra.mxu0 0.0
    %600 = vmatprep.subr.mxu0 0.0
    %601 = vmatpush2.msra.mxu0 0.0
    %602 = vmatprep.subr.mxu0 0.0
    %603 = vmatpush2.msra.mxu0 0.0
    %604 = vmatprep.subr.mxu0 0.0
    %605 = vmatpush2.msra.mxu0 0.0
    %606 = vmatprep.subr.mxu0 0.0
    %607 = vmatpush2.msra.mxu0 0.0
    %608 = vmatprep.subr.mxu0 0.0
    %609 = vmatpush2.msra.mxu0 0.0
    %610 = vmatprep.subr.mxu0 0.0
    %611 = vmatpush2.msra.mxu0 0.0
    %612 = vmatprep.subr.mxu0 0.0
    %613 = vmatpush2.msra.mxu0 0.0
    %614 = vmatprep.subr.mxu0 0.0
    %615 = vmatpush2.msra.mxu0 0.0
    %616 = vmatprep.subr.mxu0 0.0
    %617 = vmatpush2.msra.mxu0 0.0
    %618 = vmatprep.mubr.f32.mxu0 0.0
    %619 = vmatmul.mubr.f32.gmra.mxu0 %v108
    %v620 = vpop.f32.mrf.mxu0
    %v621 = vadd.f32 0.0, %v620
    %v622 = vpop.f32.mrf.mxu0
    %623 = vmatprep.mubr.f32.mxu0 0.0
    %624 = vmatmul.mubr.f32.gmra.mxu0 %v111
    %v625 = vpop.f32.mrf.mxu0
    %v626 = vadd.f32 0.0, %v625
    %v627 = vpop.f32.mrf.mxu0
    %628 = vdwg.mxu0
    %v630 = vsel %vm313, %v41, 0
    %v633 = vsel %vm313, %v42, 0
    %v636 = vsel %vm313, %v43, 0
    %v639 = vsel %vm313, %v44, 0
    %641 = vmatprep.subr.mxu0 0.0
    %642 = vmatpush1.msra.mxu0 0.0
    %643 = vmatprep.subr.mxu0 0.0
    %644 = vmatpush1.msra.mxu0 0.0
    %645 = vmatprep.subr.mxu0 0.0
    %646 = vmatpush1.msra.mxu0 0.0
    %647 = vmatprep.subr.mxu0 0.0
    %648 = vmatpush1.msra.mxu0 0.0
    %649 = vmatprep.subr.mxu0 0.0
    %650 = vmatpush1.msra.mxu0 0.0
    %651 = vmatprep.subr.mxu0 0.0
    %652 = vmatpush1.msra.mxu0 0.0
    %653 = vmatprep.subr.mxu0 0.0
    %654 = vmatpush1.msra.mxu0 0.0
    %655 = vmatprep.subr.mxu0 0.0
    %656 = vmatpush1.msra.mxu0 0.0
    %657 = vmatprep.subr.mxu0 0.0
    %658 = vmatpush1.msra.mxu0 0.0
    %659 = vmatprep.subr.mxu0 0.0
    %660 = vmatpush1.msra.mxu0 0.0
    %661 = vmatprep.subr.mxu0 0.0
    %662 = vmatpush1.msra.mxu0 0.0
    %663 = vmatprep.subr.mxu0 0.0
    %664 = vmatpush1.msra.mxu0 0.0
    %665 = vmatprep.subr.mxu0 0.0
    %666 = vmatpush1.msra.mxu0 0.0
    %667 = vmatprep.subr.mxu0 0.0
    %668 = vmatpush1.msra.mxu0 0.0
    %669 = vmatprep.subr.mxu0 0.0
    %670 = vmatpush1.msra.mxu0 %v626
    %671 = vmatprep.subr.mxu0 0.0
    %672 = vmatpush1.msra.mxu0 %v621
    %673 = vmatprep.subr.mxu0 0.0
    %674 = vmatpush2.msra.mxu0 0.0
    %675 = vmatprep.subr.mxu0 0.0
    %676 = vmatpush2.msra.mxu0 0.0
    %677 = vmatprep.subr.mxu0 0.0
    %678 = vmatpush2.msra.mxu0 0.0
    %679 = vmatprep.subr.mxu0 0.0
    %680 = vmatpush2.msra.mxu0 0.0
    %681 = vmatprep.subr.mxu0 0.0
    %682 = vmatpush2.msra.mxu0 0.0
    %683 = vmatprep.subr.mxu0 0.0
    %684 = vmatpush2.msra.mxu0 0.0
    %685 = vmatprep.subr.mxu0 0.0
    %686 = vmatpush2.msra.mxu0 0.0
    %687 = vmatprep.subr.mxu0 0.0
    %688 = vmatpush2.msra.mxu0 0.0
    %689 = vmatprep.subr.mxu0 0.0
    %690 = vmatpush2.msra.mxu0 0.0
    %691 = vmatprep.subr.mxu0 0.0
    %692 = vmatpush2.msra.mxu0 0.0
    %693 = vmatprep.subr.mxu0 0.0
    %694 = vmatpush2.msra.mxu0 0.0
    %695 = vmatprep.subr.mxu0 0.0
    %696 = vmatpush2.msra.mxu0 0.0
    %697 = vmatprep.subr.mxu0 0.0
    %698 = vmatpush2.msra.mxu0 0.0
    %699 = vmatprep.subr.mxu0 0.0
    %700 = vmatpush2.msra.mxu0 0.0
    %701 = vmatprep.subr.mxu0 0.0
    %702 = vmatpush2.msra.mxu0 0.0
    %703 = vmatprep.subr.mxu0 0.0
    %704 = vmatpush2.msra.mxu0 0.0
    %705 = vmatprep.mubr.f32.mxu0 0.0
    %706 = vmatmul.mubr.f32.gmra.mxu0 %v630
    %v707 = vpop.f32.mrf.mxu0
    %v708 = vadd.f32 0.0, %v707
    %v709 = vpop.f32.mrf.mxu0
    %710 = vmatprep.mubr.f32.mxu0 0.0
    %711 = vmatmul.mubr.f32.gmra.mxu0 %v633
    %v712 = vpop.f32.mrf.mxu0
    %v713 = vadd.f32 0.0, %v712
    %v714 = vpop.f32.mrf.mxu0
    %715 = vmatprep.mubr.f32.mxu0 0.0
    %716 = vmatmul.mubr.f32.gmra.mxu0 %v636
    %v717 = vpop.f32.mrf.mxu0
    %v718 = vadd.f32 0.0, %v717
    %v719 = vpop.f32.mrf.mxu0
    %720 = vmatprep.mubr.f32.mxu0 0.0
    %721 = vmatmul.mubr.f32.gmra.mxu0 %v639
    %v722 = vpop.f32.mrf.mxu0
    %v723 = vadd.f32 0.0, %v722
    %v724 = vpop.f32.mrf.mxu0
    %725 = vdwg.mxu0
    %v726 = vadd.f32 %v490, %v708
    %v727 = vadd.f32 %v495, %v713
    %v728 = vadd.f32 %v500, %v718
    %v729 = vadd.f32 %v505, %v723
    %v730 = vlaneseq
    %v731 = vshrl.u32 %v730, 7
    %v732 = vsub.s32 3, %v731
    %v733 = vrot.slane %v30, %v732
    %vm734 = vcmp.eq.s32.totalorder %v50, %v733
    %vm735 = vcmp.eq.s32.totalorder %v51, %v733
    %vm736 = vcmp.eq.s32.totalorder %v52, %v733
    %vm737 = vcmp.eq.s32.totalorder %v53, %v733
    %vm738 = vcmp.eq.s32.totalorder %v54, %v733
    %vm739 = vcmp.eq.s32.totalorder %v55, %v733
    %vm740 = vcmp.eq.s32.totalorder %v56, %v733
    %vm741 = vcmp.eq.s32.totalorder %v57, %v733
    %vm742 = vcmp.eq.s32.totalorder %v58, %v733
    %vm743 = vcmp.eq.s32.totalorder %v59, %v733
    %vm744 = vcmp.eq.s32.totalorder %v60, %v733
    %vm745 = vcmp.eq.s32.totalorder %v61, %v733
    %vm746 = vcmp.eq.s32.totalorder %v62, %v733
    %v747 = vsel %vm734, 1, 0
    %v748 = vsel %vm735, 1, 0
    %v749 = vsel %vm736, 1, 0
    %v750 = vsel %vm737, 1, 0
    %v751 = vsel %vm738, 1, 0
    %v752 = vsel %vm739, 1, 0
    %v753 = vsel %vm740, 1, 0
    %v754 = vsel %vm741, 1, 0
    %v755 = vsel %vm742, 1, 0
    %v756 = vsel %vm743, 1, 0
    %v757 = vsel %vm744, 1, 0
    %v758 = vsel %vm745, 1, 0
    %v759 = vsel %vm746, 1, 0
    %v760 = vcvt.s32.f32 %v747
    %v761 = vcvt.s32.f32 %v748
    %v762 = vcvt.s32.f32 %v749
    %v763 = vcvt.s32.f32 %v750
    %v764 = vcvt.s32.f32 %v751
    %v765 = vcvt.s32.f32 %v752
    %v766 = vcvt.s32.f32 %v753
    %v767 = vcvt.s32.f32 %v754
    %v768 = vcvt.s32.f32 %v755
    %v769 = vcvt.s32.f32 %v756
    %v770 = vcvt.s32.f32 %v757
    %v771 = vcvt.s32.f32 %v758
    %v772 = vcvt.s32.f32 %v759
    %v774 = vsel %vm113, %v772, 0
    %776 = vmatprep.subr.mxu0 0.0
    %777 = vmatpush1.msra.mxu0 0.0
    %778 = vmatprep.subr.mxu0 0.0
    %779 = vmatpush1.msra.mxu0 0.0
    %780 = vmatprep.subr.mxu0 0.0
    %781 = vmatpush1.msra.mxu0 0.0
    %782 = vmatprep.subr.mxu0 0.0
    %783 = vmatpush1.msra.mxu0 %v774
    %784 = vmatprep.subr.mxu0 0.0
    %785 = vmatpush1.msra.mxu0 %v771
    %786 = vmatprep.subr.mxu0 0.0
    %787 = vmatpush1.msra.mxu0 %v770
    %788 = vmatprep.subr.mxu0 0.0
    %789 = vmatpush1.msra.mxu0 %v769
    %790 = vmatprep.subr.mxu0 0.0
    %791 = vmatpush1.msra.mxu0 %v768
    %792 = vmatprep.subr.mxu0 0.0
    %793 = vmatpush1.msra.mxu0 %v767
    %794 = vmatprep.subr.mxu0 0.0
    %795 = vmatpush1.msra.mxu0 %v766
    %796 = vmatprep.subr.mxu0 0.0
    %797 = vmatpush1.msra.mxu0 %v765
    %798 = vmatprep.subr.mxu0 0.0
    %799 = vmatpush1.msra.mxu0 %v764
    %800 = vmatprep.subr.mxu0 0.0
    %801 = vmatpush1.msra.mxu0 %v763
    %802 = vmatprep.subr.mxu0 0.0
    %803 = vmatpush1.msra.mxu0 %v762
    %804 = vmatprep.subr.mxu0 0.0
    %805 = vmatpush1.msra.mxu0 %v761
    %806 = vmatprep.subr.mxu0 0.0
    %807 = vmatpush1.msra.mxu0 %v760
    %808 = vmatprep.subr.mxu0 0.0
    %809 = vmatpush2.msra.mxu0 0.0
    %810 = vmatprep.subr.mxu0 0.0
    %811 = vmatpush2.msra.mxu0 0.0
    %812 = vmatprep.subr.mxu0 0.0
    %813 = vmatpush2.msra.mxu0 0.0
    %814 = vmatprep.subr.mxu0 0.0
    %815 = vmatpush2.msra.mxu0 0.0
    %816 = vmatprep.subr.mxu0 0.0
    %817 = vmatpush2.msra.mxu0 0.0
    %818 = vmatprep.subr.mxu0 0.0
    %819 = vmatpush2.msra.mxu0 0.0
    %820 = vmatprep.subr.mxu0 0.0
    %821 = vmatpush2.msra.mxu0 0.0
    %822 = vmatprep.subr.mxu0 0.0
    %823 = vmatpush2.msra.mxu0 0.0
    %824 = vmatprep.subr.mxu0 0.0
    %825 = vmatpush2.msra.mxu0 0.0
    %826 = vmatprep.subr.mxu0 0.0
    %827 = vmatpush2.msra.mxu0 0.0
    %828 = vmatprep.subr.mxu0 0.0
    %829 = vmatpush2.msra.mxu0 0.0
    %830 = vmatprep.subr.mxu0 0.0
    %831 = vmatpush2.msra.mxu0 0.0
    %832 = vmatprep.subr.mxu0 0.0
    %833 = vmatpush2.msra.mxu0 0.0
    %834 = vmatprep.subr.mxu0 0.0
    %835 = vmatpush2.msra.mxu0 0.0
    %836 = vmatprep.subr.mxu0 0.0
    %837 = vmatpush2.msra.mxu0 0.0
    %838 = vmatprep.subr.mxu0 0.0
    %839 = vmatpush2.msra.mxu0 0.0
    %840 = vmatprep.mubr.f32.mxu0 0.0
    %841 = vmatmul.mubr.f32.gmra.mxu0 %v108
    %v842 = vpop.f32.mrf.mxu0
    %v843 = vadd.f32 0.0, %v842
    %v844 = vpop.f32.mrf.mxu0
    %845 = vmatprep.mubr.f32.mxu0 0.0
    %846 = vmatmul.mubr.f32.gmra.mxu0 %v111
    %v847 = vpop.f32.mrf.mxu0
    %v848 = vadd.f32 0.0, %v847
    %v849 = vpop.f32.mrf.mxu0
    %850 = vdwg.mxu0
    %v852 = vsel %vm313, %v45, 0
    %v855 = vsel %vm313, %v46, 0
    %v858 = vsel %vm313, %v47, 0
    %v861 = vsel %vm313, %v48, 0
    %863 = vmatprep.subr.mxu0 0.0
    %864 = vmatpush1.msra.mxu0 0.0
    %865 = vmatprep.subr.mxu0 0.0
    %866 = vmatpush1.msra.mxu0 0.0
    %867 = vmatprep.subr.mxu0 0.0
    %868 = vmatpush1.msra.mxu0 0.0
    %869 = vmatprep.subr.mxu0 0.0
    %870 = vmatpush1.msra.mxu0 0.0
    %871 = vmatprep.subr.mxu0 0.0
    %872 = vmatpush1.msra.mxu0 0.0
    %873 = vmatprep.subr.mxu0 0.0
    %874 = vmatpush1.msra.mxu0 0.0
    %875 = vmatprep.subr.mxu0 0.0
    %876 = vmatpush1.msra.mxu0 0.0
    %877 = vmatprep.subr.mxu0 0.0
    %878 = vmatpush1.msra.mxu0 0.0
    %879 = vmatprep.subr.mxu0 0.0
    %880 = vmatpush1.msra.mxu0 0.0
    %881 = vmatprep.subr.mxu0 0.0
    %882 = vmatpush1.msra.mxu0 0.0
    %883 = vmatprep.subr.mxu0 0.0
    %884 = vmatpush1.msra.mxu0 0.0
    %885 = vmatprep.subr.mxu0 0.0
    %886 = vmatpush1.msra.mxu0 0.0
    %887 = vmatprep.subr.mxu0 0.0
    %888 = vmatpush1.msra.mxu0 0.0
    %889 = vmatprep.subr.mxu0 0.0
    %890 = vmatpush1.msra.mxu0 0.0
    %891 = vmatprep.subr.mxu0 0.0
    %892 = vmatpush1.msra.mxu0 %v848
    %893 = vmatprep.subr.mxu0 0.0
    %894 = vmatpush1.msra.mxu0 %v843
    %895 = vmatprep.subr.mxu0 0.0
    %896 = vmatpush2.msra.mxu0 0.0
    %897 = vmatprep.subr.mxu0 0.0
    %898 = vmatpush2.msra.mxu0 0.0
    %899 = vmatprep.subr.mxu0 0.0
    %900 = vmatpush2.msra.mxu0 0.0
    %901 = vmatprep.subr.mxu0 0.0
    %902 = vmatpush2.msra.mxu0 0.0
    %903 = vmatprep.subr.mxu0 0.0
    %904 = vmatpush2.msra.mxu0 0.0
    %905 = vmatprep.subr.mxu0 0.0
    %906 = vmatpush2.msra.mxu0 0.0
    %907 = vmatprep.subr.mxu0 0.0
    %908 = vmatpush2.msra.mxu0 0.0
    %909 = vmatprep.subr.mxu0 0.0
    %910 = vmatpush2.msra.mxu0 0.0
    %911 = vmatprep.subr.mxu0 0.0
    %912 = vmatpush2.msra.mxu0 0.0
    %913 = vmatprep.subr.mxu0 0.0
    %914 = vmatpush2.msra.mxu0 0.0
    %915 = vmatprep.subr.mxu0 0.0
    %916 = vmatpush2.msra.mxu0 0.0
    %917 = vmatprep.subr.mxu0 0.0
    %918 = vmatpush2.msra.mxu0 0.0
    %919 = vmatprep.subr.mxu0 0.0
    %920 = vmatpush2.msra.mxu0 0.0
    %921 = vmatprep.subr.mxu0 0.0
    %922 = vmatpush2.msra.mxu0 0.0
    %923 = vmatprep.subr.mxu0 0.0
    %924 = vmatpush2.msra.mxu0 0.0
    %925 = vmatprep.subr.mxu0 0.0
    %926 = vmatpush2.msra.mxu0 0.0
    %927 = vmatprep.mubr.f32.mxu0 0.0
    %928 = vmatmul.mubr.f32.gmra.mxu0 %v852
    %v929 = vpop.f32.mrf.mxu0
    %v930 = vadd.f32 0.0, %v929
    %v931 = vpop.f32.mrf.mxu0
    %932 = vmatprep.mubr.f32.mxu0 0.0
    %933 = vmatmul.mubr.f32.gmra.mxu0 %v855
    %v934 = vpop.f32.mrf.mxu0
    %v935 = vadd.f32 0.0, %v934
    %v936 = vpop.f32.mrf.mxu0
    %937 = vmatprep.mubr.f32.mxu0 0.0
    %938 = vmatmul.mubr.f32.gmra.mxu0 %v858
    %v939 = vpop.f32.mrf.mxu0
    %v940 = vadd.f32 0.0, %v939
    %v941 = vpop.f32.mrf.mxu0
    %942 = vmatprep.mubr.f32.mxu0 0.0
    %943 = vmatmul.mubr.f32.gmra.mxu0 %v861
    %v944 = vpop.f32.mrf.mxu0
    %v945 = vadd.f32 0.0, %v944
    %v946 = vpop.f32.mrf.mxu0
    %947 = vdwg.mxu0
    %v948 = vadd.f32 %v726, %v930
    %v949 = vadd.f32 %v727, %v935
    %v950 = vadd.f32 %v728, %v940
    %v951 = vadd.f32 %v729, %v945
    %v952 = vld [vmem:[%s4] sm:$0xff]
    %v953 = vld [vmem:[%s4 + $0x8] sm:$0xff]
    %v954 = vld [vmem:[%s4 + $0x10] sm:$0xff]
    %v955 = vld [vmem:[%s4 + $0x18] sm:$0xff]
    %957 = vset.pattern.permute.xlu0 0
    %958 = vperm.xlu0 %957, %v952
    %v959 = vpop.permute.xlu0 %958
    %962 = vset.pattern.permute.xlu0 0
    %963 = vperm.xlu0 %962, %v953
    %v964 = vpop.permute.xlu0 %963
    %967 = vset.pattern.permute.xlu0 0
    %968 = vperm.xlu0 %967, %v954
    %v969 = vpop.permute.xlu0 %968
    %972 = vset.pattern.permute.xlu0 0
    %973 = vperm.xlu0 %972, %v955
    %v974 = vpop.permute.xlu0 %973
    %v976 = vadd.f32 %v948, %v959
    %v977 = vadd.f32 %v949, %v964
    %v978 = vadd.f32 %v950, %v969
    %v979 = vadd.f32 %v951, %v974
    %v980 = vmax.f32 %v976, 0.0
    %v981 = vmax.f32 %v977, 0.0
    %v982 = vmax.f32 %v978, 0.0
    %v983 = vmax.f32 %v979, 0.0
    %v984 = vld [vmem:[%s5] sm:$0xff]
    %v985 = vld [vmem:[%s5 + $0x8] sm:$0xff]
    %v986 = vld [vmem:[%s6] sm:$0xff]
    %v987 = vld [vmem:[%s6 + $0x8] sm:$0xff]
    %989 = vset.pattern.permute.xlu0 0
    %990 = vperm.xlu0 %989, %v986
    %v991 = vpop.permute.xlu0 %990
    %994 = vset.pattern.permute.xlu0 0
    %995 = vperm.xlu0 %994, %v987
    %v996 = vpop.permute.xlu0 %995
    %vm998 = vcmask 261120
    %v1000 = vsel %vm998, %v984, 0
    %v1003 = vsel %vm998, %v985, 0
    %1005 = vmatprep.subr.mxu0 0.0
    %1006 = vmatpush1.msra.mxu0 0.0
    %1007 = vmatprep.subr.mxu0 0.0
    %1008 = vmatpush1.msra.mxu0 0.0
    %1009 = vmatprep.subr.mxu0 0.0
    %1010 = vmatpush1.msra.mxu0 0.0
    %1011 = vmatprep.subr.mxu0 0.0
    %1012 = vmatpush1.msra.mxu0 0.0
    %1013 = vmatprep.subr.mxu0 0.0
    %1014 = vmatpush1.msra.mxu0 0.0
    %1015 = vmatprep.subr.mxu0 0.0
    %1016 = vmatpush1.msra.mxu0 0.0
    %1017 = vmatprep.subr.mxu0 0.0
    %1018 = vmatpush1.msra.mxu0 0.0
    %1019 = vmatprep.subr.mxu0 0.0
    %1020 = vmatpush1.msra.mxu0 0.0
    %1021 = vmatprep.subr.mxu0 0.0
    %1022 = vmatpush1.msra.mxu0 0.0
    %1023 = vmatprep.subr.mxu0 0.0
    %1024 = vmatpush1.msra.mxu0 0.0
    %1025 = vmatprep.subr.mxu0 0.0
    %1026 = vmatpush1.msra.mxu0 0.0
    %1027 = vmatprep.subr.mxu0 0.0
    %1028 = vmatpush1.msra.mxu0 0.0
    %1029 = vmatprep.subr.mxu0 0.0
    %1030 = vmatpush1.msra.mxu0 %v983
    %1031 = vmatprep.subr.mxu0 0.0
    %1032 = vmatpush1.msra.mxu0 %v982
    %1033 = vmatprep.subr.mxu0 0.0
    %1034 = vmatpush1.msra.mxu0 %v981
    %1035 = vmatprep.subr.mxu0 0.0
    %1036 = vmatpush1.msra.mxu0 %v980
    %1037 = vmatprep.subr.mxu0 0.0
    %1038 = vmatpush2.msra.mxu0 0.0
    %1039 = vmatprep.subr.mxu0 0.0
    %1040 = vmatpush2.msra.mxu0 0.0
    %1041 = vmatprep.subr.mxu0 0.0
    %1042 = vmatpush2.msra.mxu0 0.0
    %1043 = vmatprep.subr.mxu0 0.0
    %1044 = vmatpush2.msra.mxu0 0.0
    %1045 = vmatprep.subr.mxu0 0.0
    %1046 = vmatpush2.msra.mxu0 0.0
    %1047 = vmatprep.subr.mxu0 0.0
    %1048 = vmatpush2.msra.mxu0 0.0
    %1049 = vmatprep.subr.mxu0 0.0
    %1050 = vmatpush2.msra.mxu0 0.0
    %1051 = vmatprep.subr.mxu0 0.0
    %1052 = vmatpush2.msra.mxu0 0.0
    %1053 = vmatprep.subr.mxu0 0.0
    %1054 = vmatpush2.msra.mxu0 0.0
    %1055 = vmatprep.subr.mxu0 0.0
    %1056 = vmatpush2.msra.mxu0 0.0
    %1057 = vmatprep.subr.mxu0 0.0
    %1058 = vmatpush2.msra.mxu0 0.0
    %1059 = vmatprep.subr.mxu0 0.0
    %1060 = vmatpush2.msra.mxu0 0.0
    %1061 = vmatprep.subr.mxu0 0.0
    %1062 = vmatpush2.msra.mxu0 0.0
    %1063 = vmatprep.subr.mxu0 0.0
    %1064 = vmatpush2.msra.mxu0 0.0
    %1065 = vmatprep.subr.mxu0 0.0
    %1066 = vmatpush2.msra.mxu0 0.0
    %1067 = vmatprep.subr.mxu0 0.0
    %1068 = vmatpush2.msra.mxu0 0.0
    %1069 = vmatprep.mubr.f32.mxu0 0.0
    %1070 = vmatmul.mubr.f32.gmra.mxu0 %v1000
    %v1071 = vpop.f32.mrf.mxu0
    %v1072 = vadd.f32 %v991, %v1071
    %v1073 = vpop.f32.mrf.mxu0
    %1074 = vmatprep.mubr.f32.mxu0 0.0
    %1075 = vmatmul.mubr.f32.gmra.mxu0 %v1003
    %v1076 = vpop.f32.mrf.mxu0
    %v1077 = vadd.f32 %v996, %v1076
    %v1078 = vpop.f32.mrf.mxu0
    %1079 = vdwg.mxu0
    %v1080 = vmax.f32 %v1072, 0.0
    %v1081 = vmax.f32 %v1077, 0.0
    %v1082 = vld [vmem:[%s7] sm:$0xff]
    %v1083 = vld [vmem:[%s7 + $0x8] sm:$0xff]
    %1085 = vset.pattern.permute.xlu0 0
    %1086 = vperm.xlu0 %1085, %v1082
    %v1087 = vpop.permute.xlu0 %1086
    %1090 = vset.pattern.permute.xlu0 0
    %1091 = vperm.xlu0 %1090, %v1083
    %v1092 = vpop.permute.xlu0 %1091
    %v1094 = vmul.f32 %v1080, %v1087
    %v1095 = vmul.f32 %v1081, %v1092
    %v1096 = vadd.f32 %v1094, %v1095
    %v1097 = vrot.slane %v1096, 4
    %v1098 = vadd.f32 %v1096, %v1097
    %v1099 = vrot.slane %v1098, 2
    %v1100 = vadd.f32 %v1098, %v1099
    %v1101 = vrot.slane %v1100, 1
    %v1102 = vadd.f32 %v1100, %v1101
    %v1103 = vld [vmem:[%s1] sm:$0x1]
    %v1104 = vadd.f32 %v1102, %v1103
    %v1105 = vxor.u32 %v1104, 2147483648
    %v1106 = vmul.f32 %v1105, 1.442695
    %v1107 = vpow.pop %v1106
    %v1108 = vadd.f32 %v1107, 1.0
    %v1109 = vrcp.pop %v1108
    %v1110 = vmul.f32 1.0, %v1109
    %1111 = vst [vmem:[#allocation2] sm:$0x1] %v1110
    // Predicated region
    $region34: #{tpu_custom_call.1} parent=1 // pred_check
      _
    $region35: #{tpu_custom_call.1} parent=1 // pred_check_branch
      %1113 = sbr.rel (0) target = $region37
    $region36: #{tpu_custom_call.1} parent=1 // pred_region
      %s1115 = ssub.s32 16, 16
      %1116 = vsyncadd [#allocation3], %s1115
      %s1118 = sshll.u32 [#allocation2], 4
      %s1119 = int_to_ptr.vmem [resolvable:$true] %s1118
      %1121 = dma.vmem_to_hbm [thread:$0]  %s1119, 16, %s8, [#allocation3]
    $region37: #{tpu_custom_call.1} parent=1 // pred_fallthru
      _
    // Predicated region
    $region38: #{tpu_custom_call.1} parent=1 // pred_check
      _
    $region39: #{tpu_custom_call.1} parent=1 // pred_check_branch
      %1123 = sbr.rel (0) target = $region41
    $region40: #{tpu_custom_call.1} parent=1 // pred_region
      %1124 = dma.done [#allocation3], 16
    $region41: #{tpu_custom_call.1} parent=1 // pred_fallthru
      _
    %1125 = vsyncpa [#allocation3], 1

</llo_original>
